<compile_context>
chip_gen: v7x
topology: tpu7x:2x2x1
jax: 0.10.0
libtpu: 0.0.40
codegen_flags: <defaults>
</compile_context>

<pallas_src>
import functools

import numpy as np
import jax
import jax.numpy as jnp
from jax.experimental import pallas as pl
from jax.experimental.pallas import tpu as pltpu

MAX_OP_CODE = 32           # global constant referenced by the original module
MXU_DTYPE = jnp.bfloat16   # MXU operand dtype (accumulation is always f32)
PARALLEL = "parallel"
ARBITRARY = "arbitrary"


def _round_up(x, m):
    return ((x + m - 1) // m) * m


# ------------------------- in-kernel math helpers -------------------------

def _apply_act(x, act):
    if act is None:
        return x
    if act == "silu":
        return x * jax.nn.sigmoid(x)
    if act == "tanh":
        return jnp.tanh(x)
    raise ValueError(act)


def _layernorm(x, eps=1e-5):
    # nn.LayerNorm deterministic init (gamma=1, beta=0) -> identity affine.
    # Single pass: mean and mean-of-squares (halves the cross-lane reductions).
    mu = jnp.mean(x, axis=-1, keepdims=True)
    ms = jnp.mean(x * x, axis=-1, keepdims=True)
    var = jnp.maximum(ms - mu * mu, 0.0)
    return (x - mu) * jax.lax.rsqrt(var + eps)


def _mxu_dot(a, b):
    return jnp.dot(a.astype(MXU_DTYPE), b.astype(MXU_DTYPE),
                   preferred_element_type=jnp.float32)


# ------------------------- fused linear (row-tiled) -------------------------

def _fused_linear_kernel(x_ref, w_ref, b_ref, o_ref, *, pre_act, pre_ln, post_act, post_ln):
    x = x_ref[...].astype(jnp.float32)
    x = _apply_act(x, pre_act)
    if pre_ln:
        x = _layernorm(x)
    h = _mxu_dot(x, w_ref[...]) + b_ref[...]
    h = _apply_act(h, post_act)
    if post_ln:
        h = _layernorm(h)
    o_ref[...] = h


def fused_linear(x, w, b=None, *, pre_act=None, pre_ln=False, post_act=None,
                 post_ln=False, tile_m=512):
    """y = post_ln(post_act(pre_ln(pre_act(x)) @ w + b)), fused, row-tiled."""
    orig_shape = x.shape
    din = orig_shape[-1]
    dout = w.shape[1]
    x2 = x.reshape(-1, din)
    rows = x2.shape[0]
    if b is None:
        b = jnp.zeros((dout,), jnp.float32)
    b2 = b.reshape(1, dout).astype(jnp.float32)

    tm = min(tile_m, _round_up(rows, 8))
    rows_p = _round_up(rows, tm)
    if rows_p != rows:
        x2 = jnp.pad(x2, ((0, rows_p - rows), (0, 0)))

    kernel = functools.partial(_fused_linear_kernel, pre_act=pre_act, pre_ln=pre_ln,
                               post_act=post_act, post_ln=post_ln)
    out = pl.pallas_call(
        kernel,
        out_shape=jax.ShapeDtypeStruct((rows_p, dout), jnp.float32),
        grid=(rows_p // tm,),
        in_specs=[pl.BlockSpec((tm, din), lambda i: (i, 0)),
                  pl.BlockSpec((din, dout), lambda i: (0, 0)),   # weights resident
                  pl.BlockSpec((1, dout), lambda i: (0, 0))],    # bias resident
        out_specs=pl.BlockSpec((tm, dout), lambda i: (i, 0)),
        compiler_params=pltpu.CompilerParams(dimension_semantics=(PARALLEL,)),
    )(x2, w, b2)
    if rows_p != rows:
        out = out[:rows]
    return out.reshape(orig_shape[:-1] + (dout,))


# ------------------------- fused SAGE aggregation + output MLP -------------------------

def _sage_agg_mlp_kernel(projm_ref, projk_ref, a_in_ref, a_out_ref, w_ref, b_ref,
                         o_ref, acc_in_ref, acc_out_ref, *, out_dim, msg_dim, pe):
    k = pl.program_id(2)
    nk = pl.num_programs(2)

    @pl.when(k == 0)
    def _():
        acc_in_ref[...] = jnp.zeros_like(acc_in_ref)
        acc_out_ref[...] = jnp.zeros_like(acc_out_ref)

    pk = projk_ref[0]                                       # (tk, out_dim + 2*msg) f32
    p_in = pk[:, out_dim:out_dim + msg_dim]
    p_out = pk[:, out_dim + msg_dim:]
    acc_in_ref[...] += _mxu_dot(a_in_ref[...], p_in)        # (tm, msg)
    acc_out_ref[...] += _mxu_dot(a_out_ref[...], p_out)     # (tm, msg)

    @pl.when(k == nk - 1)
    def _():
        proj = projm_ref[0][:, :out_dim]                    # (tm, out_dim)
        h = jnp.concatenate([proj, acc_in_ref[...], acc_out_ref[...]], axis=-1)
        if pe:
            h = jnp.tanh(h)
            h = _mxu_dot(h, w_ref[...]) + b_ref[...]
            h = jnp.tanh(h)
        else:
            h = h * jax.nn.sigmoid(h)                       # SiLU
            h = _layernorm(h)
            h = _mxu_dot(h, w_ref[...]) + b_ref[...]
            h = h * jax.nn.sigmoid(h)
            h = _layernorm(h)
        o_ref[0] = h


def sage_agg_mlp(proj_all, A_in, A_out, mlp_w, mlp_b, *, out_dim, msg_dim, pe,
                 tile_m=256, tile_k=1024):
    """Fused (A_in @ p_in, A_out @ p_out, concat, MLP) over an (L, M-tile, K-tile) grid.

    Tile defaults keep 2 A-blocks x double-buffering well under the default scoped VMEM on
    all generations; shrink tile_k (~512) on v7x (64 MiB VMEM) for very large N.
    """
    L, N, D_all = proj_all.shape

    N8 = _round_up(N, 8)
    if N8 <= tile_k:
        tm = min(tile_m, N8)
        N_p = _round_up(N8, tm)
        tk = N_p                              # single K step
    else:
        tm, tk = tile_m, tile_k               # tk % tm == 0
        N_p = _round_up(N8, tk)

    pad_n = N_p - N
    if pad_n:
        proj_all = jnp.pad(proj_all, ((0, 0), (0, pad_n), (0, 0)))
        A_in = jnp.pad(A_in, ((0, pad_n), (0, pad_n)))
        A_out = jnp.pad(A_out, ((0, pad_n), (0, pad_n)))

    kernel = functools.partial(_sage_agg_mlp_kernel, out_dim=out_dim, msg_dim=msg_dim, pe=pe)
    out = pl.pallas_call(
        kernel,
        out_shape=jax.ShapeDtypeStruct((L, N_p, out_dim), jnp.float32),
        grid=(L, N_p // tm, N_p // tk),
        in_specs=[
            pl.BlockSpec((1, tm, D_all), lambda l, m, k: (l, m, 0)),   # proj rows (M role)
            pl.BlockSpec((1, tk, D_all), lambda l, m, k: (l, k, 0)),   # message rows (K role)
            pl.BlockSpec((tm, tk), lambda l, m, k: (m, k)),            # A_in tile
            pl.BlockSpec((tm, tk), lambda l, m, k: (m, k)),            # A_out tile
            pl.BlockSpec((D_all, out_dim), lambda l, m, k: (0, 0)),    # mlp weight resident
            pl.BlockSpec((1, out_dim), lambda l, m, k: (0, 0)),        # mlp bias resident
        ],
        out_specs=pl.BlockSpec((1, tm, out_dim), lambda l, m, k: (l, m, 0)),
        scratch_shapes=[pltpu.VMEM((tm, msg_dim), jnp.float32),
                        pltpu.VMEM((tm, msg_dim), jnp.float32)],
        compiler_params=pltpu.CompilerParams(
            dimension_semantics=(PARALLEL, PARALLEL, ARBITRARY)),
    )(proj_all, proj_all, A_in, A_out, mlp_w, mlp_b.reshape(1, -1))
    return out[:, :N]


def sage_conv(p, x, A_in, A_out, out_dim, msg_dim, pe):
    # One wide matmul for the three same-input projections: [linear | agg_in | agg_out].
    w_cat = jnp.concatenate([p["lin_w"], p["in_w"], p["out_w"]], axis=1)
    b_cat = jnp.concatenate([p["lin_b"], p["in_b"], p["out_b"]], axis=0)
    proj_all = fused_linear(x, w_cat, b_cat)          # (L, N, out_dim + 2*msg_dim)
    return sage_agg_mlp(proj_all, A_in, A_out, p["mlp_w"], p["mlp_b"],
                        out_dim=out_dim, msg_dim=msg_dim, pe=pe)


# ------------------------- fused LinFormer attention -------------------------

def _linformer_attn_kernel(offs_ref, kqv_ref, o_ref, *, kd, out_dim):
    g = pl.program_id(1)

    @pl.when(g == 0)
    def _():
        o_ref[...] = jnp.zeros_like(o_ref)

    kqv = kqv_ref[0]                                   # (N_p, 2*kd + out) f32
    start = offs_ref[g]
    stop = offs_ref[g + 1]
    row = jax.lax.broadcasted_iota(jnp.int32, (kqv.shape[0], 1), 0)
    mask = jnp.logical_and(row >= start, row < stop).astype(jnp.float32)   # (N_p, 1)

    k = kqv[:, :kd]
    q = kqv[:, kd:2 * kd]
    v = kqv[:, 2 * kd:]
    k = jnp.where(k > 0, k + 1.0, jnp.exp(k))          # elu(x) + 1
    q = jnp.where(q > 0, q + 1.0, jnp.exp(q))
    k = k * mask                                       # restrict K^T V to this graph

    # ktv = K_g^T @ V_g   (kd, out) — contract over rows, no explicit transpose op
    ktv = jax.lax.dot_general(k.astype(MXU_DTYPE), v.astype(MXU_DTYPE),
                              (((0,), (0,)), ((), ())),
                              preferred_element_type=jnp.float32)
    qktv = _mxu_dot(q, ktv)                            # (N_p, out)
    o_ref[0] += qktv * mask                            # disjoint row masks across graphs


def linformer(p, x, lengths, *, kd, out_dim):
    L, N, _ = x.shape
    # Combined K/Q/V projection (V has no bias -> zero bias columns).
    w_cat = jnp.concatenate([p["k_w"], p["q_w"], p["v_w"]], axis=1)
    b_cat = jnp.concatenate([p["k_b"], p["q_b"], jnp.zeros((out_dim,), jnp.float32)], axis=0)
    kqv = fused_linear(x, w_cat, b_cat)                # (L, N, 2*kd + out)

    G = len(lengths)
    offs_np = np.zeros((G + 1,), np.int32)
    offs_np[1:] = np.cumsum(np.asarray(lengths, np.int64))
    offs = jnp.asarray(offs_np)

    N8 = _round_up(N, 8)
    if N8 != N:
        kqv = jnp.pad(kqv, ((0, 0), (0, N8 - N), (0, 0)))

    kernel = functools.partial(_linformer_attn_kernel, kd=kd, out_dim=out_dim)
    out = pl.pallas_call(
        kernel,
        out_shape=jax.ShapeDtypeStruct((L, N8, out_dim), jnp.float32),
        grid_spec=pltpu.PrefetchScalarGridSpec(
            num_scalar_prefetch=1,              # per-graph offsets live in SMEM
            grid=(L, G),
            in_specs=[pl.BlockSpec((1, N8, 2 * kd + out_dim), lambda l, g, offs: (l, 0, 0))],
            out_specs=pl.BlockSpec((1, N8, out_dim), lambda l, g, offs: (l, 0, 0)),
        ),
        compiler_params=pltpu.CompilerParams(
            dimension_semantics=(PARALLEL, ARBITRARY)),
    )(offs, kqv)
    return out[:, :N]


# ------------------------- fused pooling + final projection -------------------------

def _pool_project_kernel(seg_ref, x_ref, w_ref, o_emb_ref, o_rt_ref):
    # Keep this tiny matmul in f32: graph_embedding is a direct model output.
    g_emb = jnp.dot(seg_ref[...], x_ref[0], preferred_element_type=jnp.float32)   # (G, D)
    o_emb_ref[0] = g_emb
    o_rt_ref[0] = jnp.dot(g_emb, w_ref[...], preferred_element_type=jnp.float32)  # (G, 1)


def pool_and_project(emb, seg, proj_w):
    L, N, D = emb.shape
    G = seg.shape[0]
    return pl.pallas_call(
        _pool_project_kernel,
        out_shape=(jax.ShapeDtypeStruct((L, G, D), jnp.float32),
                   jax.ShapeDtypeStruct((L, G, 1), jnp.float32)),
        grid=(L,),
        in_specs=[pl.BlockSpec((G, N), lambda l: (0, 0)),        # indicator stays resident
                  pl.BlockSpec((1, N, D), lambda l: (l, 0, 0)),
                  pl.BlockSpec((D, 1), lambda l: (0, 0))],
        out_specs=(pl.BlockSpec((1, G, D), lambda l: (l, 0, 0)),
                   pl.BlockSpec((1, G, 1), lambda l: (l, 0, 0))),
        compiler_params=pltpu.CompilerParams(dimension_semantics=(PARALLEL,)),
    )(seg, emb, proj_w)


# ------------------------- parameter init -------------------------

def _init_linear(key, din, dout, bias=True, scale=0.1):
    kw, kb = jax.random.split(key)
    w = jax.random.normal(kw, (din, dout), jnp.float32) * scale
    b = jax.random.normal(kb, (dout,), jnp.float32) * scale if bias else None
    return w, b


def init_params(key, cfg):
    ki = iter(jax.random.split(key, 128))
    p = {}
    p["emb_table"] = jax.random.normal(next(ki), (MAX_OP_CODE, cfg["embedding_dim"]), jnp.float32) * 0.1
    full_dim = cfg["n_normal_features"] + cfg["n_configs"] + cfg["embedding_dim"]
    p["emb_w"], p["emb_b"] = _init_linear(next(ki), full_dim, cfg["embedding_out"])
    p["lpe_w"], p["lpe_b"] = _init_linear(next(ki), cfg["n_pe_features"], cfg["pe_embedding_dim"])

    dims = [cfg["embedding_out"]] + cfg["message_network_dims"]
    layers = []
    for in_dim, out_dim in zip(dims[:-1], dims[1:]):
        lp = {}
        sage_in = cfg["pe_embedding_dim"] + in_dim
        s = {}
        s["lin_w"], s["lin_b"] = _init_linear(next(ki), sage_in, out_dim)
        s["in_w"], s["in_b"] = _init_linear(next(ki), sage_in, cfg["message_dim"])
        s["out_w"], s["out_b"] = _init_linear(next(ki), sage_in, cfg["message_dim"])
        s["mlp_w"], s["mlp_b"] = _init_linear(next(ki), out_dim + 2 * cfg["message_dim"], out_dim)
        lp["sage"] = s
        pe_msg = cfg["pe_embedding_dim"] // 2
        s = {}
        s["lin_w"], s["lin_b"] = _init_linear(next(ki), cfg["pe_embedding_dim"], cfg["pe_embedding_dim"])
        s["in_w"], s["in_b"] = _init_linear(next(ki), cfg["pe_embedding_dim"], pe_msg)
        s["out_w"], s["out_b"] = _init_linear(next(ki), cfg["pe_embedding_dim"], pe_msg)
        s["mlp_w"], s["mlp_b"] = _init_linear(next(ki), cfg["pe_embedding_dim"] + 2 * pe_msg,
                                              cfg["pe_embedding_dim"])
        lp["lpe_sage"] = s
        lf = {}
        lf["k_w"], lf["k_b"] = _init_linear(next(ki), sage_in, cfg["linformer_dim"])
        lf["q_w"], lf["q_b"] = _init_linear(next(ki), sage_in, cfg["linformer_dim"])
        lf["v_w"], _ = _init_linear(next(ki), sage_in, out_dim, bias=False)
        lp["linformer"] = lf
        lp["combi_w"], lp["combi_b"] = _init_linear(next(ki), 2 * out_dim, out_dim)
        layers.append(lp)
    p["layers"] = layers

    fin = dims[-1] + cfg["pe_embedding_dim"]
    fout = dims[-1]
    p["mlp1_w"], p["mlp1_b"] = _init_linear(next(ki), fin, fin)
    p["mlp2_w"], p["mlp2_b"] = _init_linear(next(ki), fin, fout)
    p["proj_w"], _ = _init_linear(next(ki), fout, 1, bias=False)
    return p


# ------------------------- model forward -------------------------

def forward(params, cfg, features, edge_index, lengths):
    L, N, _ = features.shape
    G = len(lengths)
    nn_f, npe = cfg["n_normal_features"], cfg["n_pe_features"]

    # --- normalized connection matrices (exact dense equivalent of the torch sparse code).
    # NOTE: the torch reference normalizes the flipped matrix with norm[edge_index[1]]
    # (i.e. 1/deg_cols indexed by the *original row*); this replicates it verbatim,
    # including COO duplicate coalescing via scatter-add. Verified against the spec.
    rows, cols = edge_index[0], edge_index[1]
    ones = jnp.ones((edge_index.shape[1],), jnp.float32)
    deg_rows = jnp.zeros((N,), jnp.float32).at[rows].add(ones)
    vals_in = ones / jnp.maximum(deg_rows, 1.0)[rows]
    A_in = jnp.zeros((N, N), jnp.float32).at[rows, cols].add(vals_in)
    deg_cols = jnp.zeros((N,), jnp.float32).at[cols].add(ones)
    vals_out = ones / jnp.maximum(deg_cols, 1.0)[rows]
    A_out = jnp.zeros((N, N), jnp.float32).at[cols, rows].add(vals_out)

    # --- feature split ---
    op_code = features[..., 0].astype(jnp.int32)
    normal = features[..., 1:1 + nn_f]
    lpe = features[..., 1 + nn_f:1 + nn_f + npe]
    configs = features[..., 1 + nn_f + npe:]
    feat = jnp.concatenate([normal, configs], axis=-1)

    # --- embedding input layer (gather is plain-JAX glue; MLP is the fused kernel) ---
    emb = jnp.take(params["emb_table"], op_code, axis=0)
    x = jnp.concatenate([emb, feat], axis=-1)
    emb_features = fused_linear(x, params["emb_w"], params["emb_b"], post_act="silu", post_ln=True)
    lpe_features = fused_linear(lpe, params["lpe_w"], params["lpe_b"], post_act="tanh")

    msg_dim = cfg["message_dim"]
    pe_dim = cfg["pe_embedding_dim"]
    dims = [cfg["embedding_out"]] + cfg["message_network_dims"]
    for lp, out_dim in zip(params["layers"], dims[1:]):
        emb_features = jnp.concatenate([lpe_features, emb_features], axis=-1)
        sage_features = sage_conv(lp["sage"], emb_features, A_in, A_out,
                                  out_dim, msg_dim, pe=False)
        new_lpe = sage_conv(lp["lpe_sage"], lpe_features, A_in, A_out,
                            pe_dim, pe_dim // 2, pe=True)
        linformer_features = linformer(lp["linformer"], emb_features, lengths,
                                       kd=cfg["linformer_dim"], out_dim=out_dim)
        lpe_features = new_lpe
        emb_features = jnp.concatenate([sage_features, linformer_features], axis=-1)
        emb_features = fused_linear(emb_features, lp["combi_w"], lp["combi_b"],
                                    post_act="silu", post_ln=True)

    emb_features = jnp.concatenate([lpe_features, emb_features], axis=-1)
    emb_features = fused_linear(emb_features, params["mlp1_w"], params["mlp1_b"],
                                post_act="silu", post_ln=True)
    emb_features = fused_linear(emb_features, params["mlp2_w"], params["mlp2_b"],
                                post_act="silu", post_ln=True)

    # --- per-graph sum pooling + runtime projection (fused; seg stays resident) ---
    index = np.concatenate([np.full(l, i) for i, l in enumerate(lengths)])
    seg = jnp.asarray(np.eye(G, dtype=np.float32)[:, index])             # (G, N)
    graph_embedding, rt = pool_and_project(emb_features, seg, params["proj_w"])
    runtimes = jnp.squeeze(jnp.transpose(rt, (1, 0, 2)), axis=-1)        # (G, L)
    return graph_embedding, runtimes


# ------------------------- demo -------------------------

if __name__ == "__main__":
    cfg = dict(
        embedding_out=16,
        message_network_dims=[16, 16],
        n_normal_features=6,
        n_pe_features=4,
        n_configs=3,
        embedding_dim=8,
        pe_embedding_dim=8,
        message_dim=8,
        linformer_dim=8,
    )
    lengths = [5, 3]          # two graphs concatenated (must be static Python ints)
    L = 2                     # list (config batch) dim
    N = sum(lengths)
    C = 1 + cfg["n_normal_features"] + cfg["n_pe_features"] + cfg["n_configs"]

    root = jax.random.PRNGKey(0)
    kp, kop, kfeat, kedge = jax.random.split(root, 4)
    params = init_params(kp, cfg)

    op_code = jax.random.randint(kop, (L, N, 1), 0, MAX_OP_CODE).astype(jnp.float32)
    other = jax.random.normal(kfeat, (L, N, C - 1), jnp.float32)
    features = jnp.concatenate([op_code, other], axis=-1)            # (2, 8, 14)
    edge_index = jax.random.randint(kedge, (2, 12), 0, N)            # (2, E)

    graph_embedding, runtimes = forward(params, cfg, features, edge_index, lengths)
    jax.block_until_ready((graph_embedding, runtimes))
    assert graph_embedding.shape == (L, len(lengths), cfg["message_network_dims"][-1])
    assert runtimes.shape == (len(lengths), L)
    # TODO(synk): dropout layer exists in __init__ but is never applied in the torch forward.
    print("KERNEL_OK")
</pallas_src>

<mosaic_0001>
module attributes {stable_mosaic.version = 11 : i64} {
  func.func @_fused_linear_kernel(%arg0: i32, %arg1: memref<16x17xf32, #tpu.memory_space<vmem>>, %arg2: memref<17x16xf32, #tpu.memory_space<vmem>>, %arg3: memref<1x16xf32, #tpu.memory_space<vmem>>, %arg4: memref<16x16xf32, #tpu.memory_space<vmem>>) attributes {dimension_semantics = [#tpu.dimension_semantics<parallel>], iteration_bounds = array<i64: 1>, scalar_prefetch = 0 : i64, scratch_operands = 0 : i64, tpu.core_type = #tpu.core_type<tc>, window_params = [{transform_indices = @transform_0, window_bounds = array<i64: 16, 17>}, {pipeline_mode = #tpu.pipeline_mode<synchronous>, transform_indices = @transform_1, window_bounds = array<i64: 17, 16>}, {pipeline_mode = #tpu.pipeline_mode<synchronous>, transform_indices = @transform_2, window_bounds = array<i64: 1, 16>}, {transform_indices = @transform_3, window_bounds = array<i64: 16, 16>}]} {
    %c0 = arith.constant 0 : index
    %c0_0 = arith.constant 0 : index
    %0 = vector.load %arg1[%c0, %c0_0] : memref<16x17xf32, #tpu.memory_space<vmem>>, vector<16x17xf32>
    %c0_1 = arith.constant 0 : index
    %c0_2 = arith.constant 0 : index
    %1 = vector.load %arg2[%c0_1, %c0_2] : memref<17x16xf32, #tpu.memory_space<vmem>>, vector<17x16xf32>
    %2 = arith.truncf %0 : vector<16x17xf32> to vector<16x17xbf16>
    %3 = arith.truncf %1 : vector<17x16xf32> to vector<17x16xbf16>
    %cst = arith.constant dense<0.000000e+00> : vector<16x16xf32>
    %4 = tpu.matmul %2, %3, %cst {dimension_numbers = #tpu.dot_dimension_numbers<[1], [0], [0], [1], [0, 0, 1, 1], [], []>} : vector<16x17xbf16>, vector<17x16xbf16>, vector<16x16xf32> -> vector<16x16xf32>
    %c0_3 = arith.constant 0 : index
    %c0_4 = arith.constant 0 : index
    %5 = vector.load %arg3[%c0_3, %c0_4] : memref<1x16xf32, #tpu.memory_space<vmem>>, vector<1x16xf32>
    %6 = vector.broadcast %5 : vector<1x16xf32> to vector<16x16xf32>
    %7 = arith.addf %4, %6 : vector<16x16xf32>
    %8 = arith.negf %7 : vector<16x16xf32>
    %9 = math.exp %8 : vector<16x16xf32>
    %cst_5 = arith.constant 1.000000e+00 : f32
    %10 = vector.broadcast %cst_5 : f32 to vector<16x16xf32>
    %11 = arith.addf %10, %9 : vector<16x16xf32>
    %12 = arith.divf %10, %11 : vector<16x16xf32>
    %13 = arith.mulf %7, %12 : vector<16x16xf32>
    %cst_6 = arith.constant dense<0.000000e+00> : vector<16xf32>
    %14 = vector.multi_reduction <add>, %13, %cst_6 [1] : vector<16x16xf32> to vector<16xf32>
    %15 = vector.shape_cast %14 : vector<16xf32> to vector<16x1xf32>
    %cst_7 = arith.constant 1.600000e+01 : f32
    %16 = vector.broadcast %cst_7 : f32 to vector<16x1xf32>
    %17 = arith.divf %15, %16 : vector<16x1xf32>
    %18 = arith.mulf %13, %13 : vector<16x16xf32>
    %cst_8 = arith.constant dense<0.000000e+00> : vector<16xf32>
    %19 = vector.multi_reduction <add>, %18, %cst_8 [1] : vector<16x16xf32> to vector<16xf32>
    %20 = vector.shape_cast %19 : vector<16xf32> to vector<16x1xf32>
    %cst_9 = arith.constant 1.600000e+01 : f32
    %21 = vector.broadcast %cst_9 : f32 to vector<16x1xf32>
    %22 = arith.divf %20, %21 : vector<16x1xf32>
    %23 = arith.mulf %17, %17 : vector<16x1xf32>
    %24 = arith.subf %22, %23 : vector<16x1xf32>
    %cst_10 = arith.constant 0.000000e+00 : f32
    %25 = vector.broadcast %cst_10 : f32 to vector<16x1xf32>
    %26 = arith.maximumf %24, %25 : vector<16x1xf32>
    %27 = vector.broadcast %17 : vector<16x1xf32> to vector<16x16xf32>
    %28 = arith.subf %13, %27 : vector<16x16xf32>
    %cst_11 = arith.constant 9.99999974E-6 : f32
    %29 = vector.broadcast %cst_11 : f32 to vector<16x1xf32>
    %30 = arith.addf %26, %29 : vector<16x1xf32>
    %31 = math.rsqrt %30 : vector<16x1xf32>
    %32 = vector.broadcast %31 : vector<16x1xf32> to vector<16x16xf32>
    %33 = arith.mulf %28, %32 : vector<16x16xf32>
    %c0_12 = arith.constant 0 : index
    %c0_13 = arith.constant 0 : index
    %34 = vector.load %arg4[%c0_12, %c0_13] : memref<16x16xf32, #tpu.memory_space<vmem>>, vector<16x16xf32>
    tpu.vector_store %arg4[%c0_12, %c0_13], %33 {strides = array<i32>} : memref<16x16xf32, #tpu.memory_space<vmem>>, vector<16x16xf32>,
    return
  }
  func.func @transform_0(%arg0: i32) -> (i32, i32) {
    %c0_i32 = arith.constant 0 : i32
    %c0_i32_0 = arith.constant 0 : i32
    return %arg0, %c0_i32 : i32, i32
  }
  func.func @transform_1(%arg0: i32) -> (i32, i32) {
    %c0_i32 = arith.constant 0 : i32
    %c0_i32_0 = arith.constant 0 : i32
    %c0_i32_1 = arith.constant 0 : i32
    return %c0_i32, %c0_i32_0 : i32, i32
  }
  func.func @transform_2(%arg0: i32) -> (i32, i32) {
    %c0_i32 = arith.constant 0 : i32
    %c0_i32_0 = arith.constant 0 : i32
    %c0_i32_1 = arith.constant 0 : i32
    return %c0_i32, %c0_i32_0 : i32, i32
  }
  func.func @transform_3(%arg0: i32) -> (i32, i32) {
    %c0_i32 = arith.constant 0 : i32
    %c0_i32_0 = arith.constant 0 : i32
    return %arg0, %c0_i32 : i32, i32
  }
}

</mosaic_0001>

<llo_original>
// kernel: tpu_custom_call.1
$region0: #{tpu_custom_call.1}
  #allocation0 [shape = 'u32[]', space=smem, size = 0x4, offset = 0x4, fixed_abs, tag = 'smem constant byte address 0x4 - core index']
  #allocation1 [shape = 'u32[144,128]{1,0:T(1,128)}', space=vmem, size = 0x12000, scoped, tag = 'internal scratch']
  %s0 = inlined_call_operand.vmem [shape: f32[16,17], index: 0, kind: input, shape index: {}]
  %s1 = inlined_call_operand.vmem [shape: f32[17,16], index: 1, kind: input, shape index: {}]
  %s2 = inlined_call_operand.vmem [shape: f32[1,16], index: 2, kind: input, shape index: {}]
  %s3 = inlined_call_operand.hbm [shape: f32[16,16], index: 3, kind: output, shape index: {}]
  %s4 = sld [smem:[#allocation0]]
  $region22: #{tpu_custom_call.1} parent=0
    _
  %s6 = ssub.s32 1, %s4
  %s7 = scalar_select 0, %s6, %s4
  $region1: #{tpu_custom_call.1} parent=0
    #allocation2 [shape = 'u8[8192]{0}', space=vmem, size = 0x2000, scoped, tag = 'output window, operand 0, single buffered']
    #allocation3 [shape = 's32[1]{0}', space=sflag, size = 0x4, scoped, tag = 'scoped memory for tpu_custom_call.1']
    %8 = vsyncpa [#allocation3], 0
    // Predicated region
    $region2: #{tpu_custom_call.1} parent=1 // pred_check
      _
    $region3: #{tpu_custom_call.1} parent=1 // pred_check_branch
      %10 = sbr.rel (0) target = $region5
    $region4: #{tpu_custom_call.1} parent=1 // pred_region
      _
    $region5: #{tpu_custom_call.1} parent=1 // pred_fallthru
      _
    // Predicated region
    $region6: #{tpu_custom_call.1} parent=1 // pred_check
      _
    $region7: #{tpu_custom_call.1} parent=1 // pred_check_branch
      %12 = sbr.rel (0) target = $region9
    $region8: #{tpu_custom_call.1} parent=1 // pred_region
      _
    $region9: #{tpu_custom_call.1} parent=1 // pred_fallthru
      _
    // Predicated region
    $region10: #{tpu_custom_call.1} parent=1 // pred_check
      _
    $region11: #{tpu_custom_call.1} parent=1 // pred_check_branch
      %14 = sbr.rel (0) target = $region13
    $region12: #{tpu_custom_call.1} parent=1 // pred_region
      _
    $region13: #{tpu_custom_call.1} parent=1 // pred_fallthru
      _
    %v16 = vld [vmem:[%s0] sm:$0xff]
    %v17 = vld [vmem:[%s0 + $0x8] sm:$0xff]
    %v18 = vld [vmem:[%s1] sm:$0xff]
    %v19 = vld [vmem:[%s1 + $0x8] sm:$0xff]
    %v20 = vld [vmem:[%s1 + $0x10] sm:$0x1]
    %v21 = vpack.c.bf16 %v17, %v16
    %v22 = vpack.c.bf16 %v19, %v18
    %v23 = vpack.c.bf16 %v20, %v20
    %v24 = vld [vmem:[%s2] sm:$0x1]
    %v26 = vlaneseq
    %v27 = vshrl.u32 %v26, 7
    %v28 = vsub.s32 0, %v27
    %v29 = vrot.slane %v24, %v28
    %vm31 = vcmask 138240
    %v33 = vsel %vm31, %v21, 0
    %vm35 = vcmask 1040384
    %v36 = vsel 0, 4294967295, 65535
    %v37 = vsel %vm35, %v36, 0
    %v39 = vand.u32 %v23, %v37
    %41 = vmatprep.subr.bf16.mxu0 0
    %42 = vmatpush1.bf16.msra.mxu0 %v22
    %43 = vmatprep.subr.bf16.mxu0 0
    %44 = vmatpush1.bf16.msra.mxu0 %v39
    %45 = vmatprep.subr.bf16.mxu0 0
    %46 = vmatpush1.bf16.msra.mxu0 0
    %47 = vmatprep.subr.bf16.mxu0 0
    %48 = vmatpush1.bf16.msra.mxu0 0
    %49 = vmatprep.subr.bf16.mxu0 0
    %50 = vmatpush1.bf16.msra.mxu0 0
    %51 = vmatprep.subr.bf16.mxu0 0
    %52 = vmatpush1.bf16.msra.mxu0 0
    %53 = vmatprep.subr.bf16.mxu0 0
    %54 = vmatpush1.bf16.msra.mxu0 0
    %55 = vmatprep.subr.bf16.mxu0 0
    %56 = vmatpush1.bf16.msra.mxu0 0
    %57 = vmatprep.subr.bf16.mxu0 0
    %58 = vmatpush1.bf16.msra.mxu0 0
    %59 = vmatprep.subr.bf16.mxu0 0
    %60 = vmatpush1.bf16.msra.mxu0 0
    %61 = vmatprep.subr.bf16.mxu0 0
    %62 = vmatpush1.bf16.msra.mxu0 0
    %63 = vmatprep.subr.bf16.mxu0 0
    %64 = vmatpush1.bf16.msra.mxu0 0
    %65 = vmatprep.subr.bf16.mxu0 0
    %66 = vmatpush1.bf16.msra.mxu0 0
    %67 = vmatprep.subr.bf16.mxu0 0
    %68 = vmatpush1.bf16.msra.mxu0 0
    %69 = vmatprep.subr.bf16.mxu0 0
    %70 = vmatpush1.bf16.msra.mxu0 0
    %71 = vmatprep.subr.bf16.mxu0 0
    %72 = vmatpush1.bf16.msra.mxu0 0
    %73 = vmatprep.mubr.bf16.mxu0 0
    %74 = vmatmul.mubr.bf16.gmra.mrb[0].mxu0 %v33
    %v75 = vpop.f32.mrb[0].mxu0
    %v76 = vadd.f32 %v29, %v75
    %v77 = vpop.f32.mrb[0].mxu0
    %v78 = vpop.f32.mrb[0].mxu0
    %v79 = vadd.f32 %v29, %v78
    %v80 = vpop.f32.mrb[0].mxu0
    %81 = vdwg.mxu0
    %v82 = vxor.u32 %v76, 2147483648
    %v83 = vxor.u32 %v79, 2147483648
    %v84 = vmul.f32 %v82, 1.442695
    %v85 = vpow.pop %v84
    %v86 = vmul.f32 %v83, 1.442695
    %v87 = vpow.pop %v86
    %v88 = vadd.f32 %v85, 1.0
    %v89 = vadd.f32 %v87, 1.0
    %v90 = vrcp.pop %v88
    %v91 = vmul.f32 1.0, %v90
    %v92 = vrcp.pop %v89
    %v93 = vmul.f32 1.0, %v92
    %v94 = vmul.f32 %v76, %v91
    %v95 = vmul.f32 %v79, %v93
    %vm96 = vcmask 130048
    %v97 = vsel %vm96, %v94, 0.0
    %98 = vadd.xlane.f32.xlu0 %v97
    %v99 = vpop.xlane.xlu0 %98
    %v100 = vsel %vm96, %v95, 0.0
    %101 = vadd.xlane.f32.xlu0 %v100
    %v102 = vpop.xlane.xlu0 %101
    %v103 = vrcp.pop 16.0
    %v104 = vmul.f32 %v99, %v103
    %v105 = vmul.f32 %v102, %v103
    %v106 = vmul.f32 %v94, %v94
    %v107 = vmul.f32 %v95, %v95
    %v108 = vsel %vm96, %v106, 0.0
    %109 = vadd.xlane.f32.xlu0 %v108
    %v110 = vpop.xlane.xlu0 %109
    %v111 = vsel %vm96, %v107, 0.0
    %112 = vadd.xlane.f32.xlu0 %v111
    %v113 = vpop.xlane.xlu0 %112
    %v114 = vmul.f32 %v110, %v103
    %v115 = vmul.f32 %v113, %v103
    %v116 = vmul.f32 %v104, %v104
    %v117 = vmul.f32 %v105, %v105
    %v118 = vsub.f32 %v114, %v116
    %v119 = vsub.f32 %v115, %v117
    %v120 = vmax.f32 %v118, 0.0
    %v121 = vmax.f32 %v119, 0.0
    %v122 = vsub.f32 %v94, %v104
    %v123 = vsub.f32 %v95, %v105
    %v124 = vadd.f32 %v120, 1e-05
    %v125 = vadd.f32 %v121, 1e-05
    %v126 = vrsqrt.pop %v124
    %v127 = vrsqrt.pop %v125
    %v128 = vmul.f32 %v122, %v126
    %v129 = vmul.f32 %v123, %v127
    %130 = vst.msk [vmem:[#allocation2] sm:$0xff] %vm96, %v128
    %131 = vst.msk [vmem:[#allocation2 + $0x8] sm:$0xff] %vm96, %v129
    // Predicated region
    $region14: #{tpu_custom_call.1} parent=1 // pred_check
      _
    $region15: #{tpu_custom_call.1} parent=1 // pred_check_branch
      %133 = sbr.rel (0) target = $region17
    $region16: #{tpu_custom_call.1} parent=1 // pred_region
      %s135 = ssub.s32 256, 256
      %136 = vsyncadd [#allocation3], %s135
      %s137 = sshll.u32 [#allocation2], 4
      %s138 = int_to_ptr.vmem [resolvable:$true] %s137
      %143 = dma.vmem_to_hbm [thread:$0]  %s138, 256, %s3, [#allocation3], 128, 128, 8
    $region17: #{tpu_custom_call.1} parent=1 // pred_fallthru
      _
    // Predicated region
    $region18: #{tpu_custom_call.1} parent=1 // pred_check
      _
    $region19: #{tpu_custom_call.1} parent=1 // pred_check_branch
      %145 = sbr.rel (0) target = $region21
    $region20: #{tpu_custom_call.1} parent=1 // pred_region
      %146 = dma.done [#allocation3], 256
    $region21: #{tpu_custom_call.1} parent=1 // pred_fallthru
      _
    %147 = vsyncpa [#allocation3], 1

</llo_original>
